<compile_context>
chip_gen: v6e
topology: v6e:2x2x1
jax: 0.10.0
libtpu: 0.0.40
codegen_flags: <defaults>
</compile_context>

<pallas_src>
import functools

import jax
import jax.numpy as jnp
from jax.experimental import pallas as pl
from jax.experimental.pallas import tpu as pltpu

_LANE = 128
_MAX_BATCH_TILE = 1024     # raise the tile cap when the VMEM budget allows
_TARGET_BATCH_TILE = 256   # keep >= this many rows/tile before tiling hidden


def _round_up(n, m):
    return ((n + m - 1) // m) * m


def _sublane(itemsize):
    # native sublane multiple: 8 for 4-byte, 16 for 2-byte, 32 for 1-byte
    return max(8, 32 // max(1, itemsize))


def _vmem_block_bytes(rows, cols, itemsize):
    """VMEM footprint of one (rows, cols) tile after (sublane, 128) padding."""
    return (_round_up(max(rows, 1), _sublane(itemsize))
            * _round_up(max(cols, 1), _LANE) * itemsize)


@functools.lru_cache(maxsize=None)
def _tpu_memory_plan():
    """(vmem_budget_bytes, vmem_limit_bytes, multi_tensorcore) for this chip."""
    try:
        capacity = int(pltpu.get_tpu_info().vmem_capacity_bytes)
    except Exception:
        capacity = 64 << 20          # conservative fallback: v7x physical VMEM
    # Scoped limit: 3/4 of physical, capped; leave slack inside it for the
    # compiler's own scratch.  v5e/v6e (128 MiB) -> 96 MiB, v7x (64) -> 48 MiB.
    vmem_limit = min(capacity * 3 // 4, 96 << 20)
    budget = max(vmem_limit - (4 << 20), 8 << 20)
    try:
        kind = jax.devices()[0].device_kind.lower()
        multi_tc = any(tag in kind for tag in ("v4", "v5p", "v7", "7x"))
    except Exception:
        multi_tc = False
    return budget, vmem_limit, multi_tc


def _weight_footprint(obs, n_actions, th, cdt_itemsize):
    # Resident weight/bias blocks, assuming the default 2x pipeline buffering.
    return 2 * (_vmem_block_bytes(obs, th, cdt_itemsize)
                + _vmem_block_bytes(th, n_actions, cdt_itemsize)
                + _vmem_block_bytes(1, th, 4)
                + _vmem_block_bytes(1, n_actions, 4))


def _per_row_footprint(obs, n_actions, th, x_itemsize, cdt_itemsize):
    obs_l = _round_up(max(obs, 1), _LANE)
    act_l = _round_up(max(n_actions, 1), _LANE)
    return (2 * obs_l * x_itemsize       # x block, double-buffered
            + 3 * act_l * 4              # out block (x2) + f32 accumulator
            + th * 4                     # h in f32
            + th * cdt_itemsize          # h rounded to the compute dtype
            + obs_l * cdt_itemsize       # x cast to the compute dtype
            + act_l * 4)                 # layer-2 partial before +=


def _choose_hidden_tile(obs, hidden, n_actions, x_itemsize, cdt_itemsize, budget):
    """Largest hidden tile (multiple of 128) that still leaves a decent batch tile."""
    hid_l = _round_up(hidden, _LANE)
    nh = 1
    while True:
        th = _round_up(pl.cdiv(hid_l, nh), _LANE)
        headroom = budget - _weight_footprint(obs, n_actions, th, cdt_itemsize)
        rows = headroom // _per_row_footprint(obs, n_actions, th,
                                              x_itemsize, cdt_itemsize)
        if rows >= _TARGET_BATCH_TILE or th <= _LANE:
            return th, pl.cdiv(hid_l, th)
        nh += 1


def _choose_batch_tile(batch, obs, n_actions, th, x_itemsize, cdt_itemsize,
                       budget, multi_tc):
    sub = _sublane(x_itemsize)
    if batch <= sub:
        return batch                              # full-extent batch block
    headroom = budget - _weight_footprint(obs, n_actions, th, cdt_itemsize)
    per_row = _per_row_footprint(obs, n_actions, th, x_itemsize, cdt_itemsize)
    tb = max(headroom // per_row, sub)
    tb = min(_MAX_BATCH_TILE, (tb // sub) * sub, (batch // sub) * sub)
    tb = max(tb, sub)
    # Megacore chips only (2 TensorCores): give the parallel batch axis >= 2
    # grid steps, but never at the price of sub-256-row tiles.
    if multi_tc and pl.cdiv(batch, tb) < 2 and tb >= 512:
        tb = _round_up(pl.cdiv(tb, 2), sub)
    return tb


def _clamp_batch_tile(tb, batch, x_itemsize):
    sub = _sublane(x_itemsize)
    if batch <= sub or tb >= batch:
        return batch
    return max(sub, (min(tb, batch) // sub) * sub)


def _mlp_kernel(x_ref, w1_ref, b1_ref, w2_ref, b2_ref, o_ref, acc_ref):
    j = pl.program_id(1)            # hidden-block index (innermost, "arbitrary")

    @pl.when(j == 0)
    def _init():
        acc_ref[...] = jnp.zeros_like(acc_ref)

    # Layer 1 on the MXU with f32 accumulation; bias-add + ReLU in f32 on the
    # VPU (v5e has no bf16 VALU).  x is cast in-kernel (no wrapper copy).
    x = x_ref[...].astype(w1_ref.dtype)
    h = jnp.dot(x, w1_ref[...], preferred_element_type=jnp.float32)
    h = jnp.maximum(h + b1_ref[...], 0.0)

    # Layer-2 partial for this hidden block, accumulated in f32.
    acc_ref[...] += jnp.dot(h.astype(w2_ref.dtype), w2_ref[...],
                            preferred_element_type=jnp.float32)

    @pl.when(j == pl.num_programs(1) - 1)
    def _finalize():
        o_ref[...] = (acc_ref[...] + b2_ref[...]).astype(o_ref.dtype)


def prepare_params(w1, b1, w2, b2, *, compute_dtype=jnp.bfloat16,
                   vmem_budget_bytes=None):
    """One-time pad + cast of the Linear params (hoisted out of the forward).

    w1: (obs_size, hidden)   -- already transposed vs. torch's (out, in)
    b1: (hidden,) or (1, hidden)
    w2: (hidden, n_actions)
    b2: (n_actions,) or (1, n_actions)
    compute_dtype: matmul operand dtype.  bf16 (default) is the native MXU
        dtype on v6e/v7x; accumulation is always f32.  Pass jnp.float32 for
        exact parity with the PyTorch module.
    """
    obs, hidden = w1.shape
    n_actions = w2.shape[1]
    cdt = jnp.dtype(compute_dtype)

    budget, vmem_limit, multi_tc = _tpu_memory_plan()
    if vmem_budget_bytes is not None:
        budget = int(vmem_budget_bytes)

    th, nh = _choose_hidden_tile(obs, hidden, n_actions, 4, cdt.itemsize, budget)
    hid_p = th * nh

    # Zero padding of the hidden dim is exact: padded w1 columns / b1 entries
    # are zero (relu(0) = 0) and meet zero rows of w2.
    w1p = jnp.pad(w1.astype(cdt), ((0, 0), (0, hid_p - hidden)))
    w2p = jnp.pad(w2.astype(cdt), ((0, hid_p - hidden), (0, 0)))
    # Biases stay f32: the bias-add + ReLU run in f32 inside the kernel.
    b1p = jnp.pad(jnp.reshape(b1, (1, hidden)).astype(jnp.float32),
                  ((0, 0), (0, hid_p - hidden)))
    b2p = jnp.reshape(b2, (1, n_actions)).astype(jnp.float32)

    return {
        "w1": w1p, "b1": b1p, "w2": w2p, "b2": b2p,
        "obs_size": obs, "hidden": hidden, "n_actions": n_actions,
        "hid_p": hid_p, "th": th, "nh": nh, "compute_dtype": cdt,
        "vmem_budget": budget, "vmem_limit": vmem_limit, "multi_tc": multi_tc,
    }


def net_forward(x, params, *, block_batch=None):
    """Forward of Net: relu(x @ w1 + b1) @ w2 + b2, params from prepare_params()."""
    B, obs = x.shape
    if obs != params["obs_size"]:
        raise ValueError(f"x has obs={obs}, params expect {params['obs_size']}")
    n_actions = params["n_actions"]
    th, nh = params["th"], params["nh"]
    cdt = params["compute_dtype"]

    if block_batch is None:
        tb = _choose_batch_tile(B, obs, n_actions, th, x.dtype.itemsize,
                                cdt.itemsize, params["vmem_budget"],
                                params["multi_tc"])
    else:
        tb = _clamp_batch_tile(block_batch, B, x.dtype.itemsize)
    nb = pl.cdiv(B, tb)

    return pl.pallas_call(
        _mlp_kernel,
        out_shape=jax.ShapeDtypeStruct((B, n_actions), x.dtype),
        grid_spec=pltpu.PrefetchScalarGridSpec(
            num_scalar_prefetch=0,
            grid=(nb, nh),          # (batch blocks, hidden blocks); hidden last
            in_specs=[
                # x batch tile: obs rides as a full-extent last dim; the
                # remainder batch block is clipped on load/store (no pad copy).
                pl.BlockSpec((tb, obs), lambda i, j: (i, 0)),
                # Weights / biases: hidden is the only tiled dim.  With nh == 1
                # the index_map is constant -> DMA'd once, resident across the
                # whole batch grid.
                pl.BlockSpec((obs, th), lambda i, j: (0, j)),
                pl.BlockSpec((1, th), lambda i, j: (0, j)),
                pl.BlockSpec((th, n_actions), lambda i, j: (j, 0)),
                pl.BlockSpec((1, n_actions), lambda i, j: (0, 0)),
            ],
            # Unpadded (tb, n_actions) output block: the HBM output stream is
            # exactly the logical result (no 128-lane padded slab, no wrapper
            # slice afterwards).
            out_specs=pl.BlockSpec((tb, n_actions), lambda i, j: (i, 0)),
            scratch_shapes=[pltpu.VMEM((tb, n_actions), jnp.float32)],
        ),
        compiler_params=pltpu.CompilerParams(
            dimension_semantics=("parallel", "arbitrary"),
            vmem_limit_bytes=params["vmem_limit"],
        ),
    )(x, params["w1"], params["b1"], params["w2"], params["b2"])


def init_params(key, obs_size, hidden_size, n_actions, dtype=jnp.float32):
    """PyTorch-style init: U(-1/sqrt(fan_in), 1/sqrt(fan_in)); weights stored (in, out)."""
    k1, k2, k3, k4 = jax.random.split(key, 4)
    bound1 = 1.0 / jnp.sqrt(jnp.float32(obs_size))
    bound2 = 1.0 / jnp.sqrt(jnp.float32(hidden_size))
    w1 = jax.random.uniform(k1, (obs_size, hidden_size), dtype, -bound1, bound1)
    b1 = jax.random.uniform(k2, (1, hidden_size), dtype, -bound1, bound1)
    w2 = jax.random.uniform(k3, (hidden_size, n_actions), dtype, -bound2, bound2)
    b2 = jax.random.uniform(k4, (1, n_actions), dtype, -bound2, bound2)
    return w1, b1, w2, b2


if __name__ == "__main__":
    key = jax.random.PRNGKey(0)
    k1, k2, k3, k4, k5, k6 = jax.random.split(key, 6)

    # 1) CartPole-sized Net (obs=4, hidden=128, actions=2), exact f32 path.
    B, OBS, HID, ACT = 8, 4, 128, 2
    x = jax.random.normal(k1, (B, OBS), dtype=jnp.float32)
    w1, b1, w2, b2 = init_params(k2, OBS, HID, ACT)
    params = prepare_params(w1, b1, w2, b2, compute_dtype=jnp.float32)
    out = jax.block_until_ready(net_forward(x, params))
    ref = jnp.maximum(x @ w1 + b1, 0.0) @ w2 + b2
    assert out.shape == (B, ACT)
    assert jnp.allclose(out, ref, atol=1e-4, rtol=1e-4), "f32 path mismatch"

    # 2) Larger batch with a remainder tile, default bf16 compute (f32 accum).
    B2, OBS2, HID2, ACT2 = 300, 32, 200, 6
    x2 = jax.random.normal(k3, (B2, OBS2), dtype=jnp.float32)
    p2 = init_params(k4, OBS2, HID2, ACT2)
    params2 = prepare_params(*p2)                     # compute_dtype=bf16
    out2 = jax.block_until_ready(net_forward(x2, params2))
    ref2 = jnp.maximum(x2 @ p2[0] + p2[1], 0.0) @ p2[2] + p2[3]
    assert out2.shape == (B2, ACT2)
    assert jnp.allclose(out2, ref2, atol=1e-1, rtol=1e-1), "bf16 path mismatch"

    # 3) Force the hidden-tiling fallback with a tiny VMEM budget (exercises
    #    the accumulator init/finalize path); f32 so the check stays tight.
    B3, OBS3, HID3, ACT3 = 64, 32, 384, 6
    x3 = jax.random.normal(k5, (B3, OBS3), dtype=jnp.float32)
    p3 = init_params(k6, OBS3, HID3, ACT3)
    params3 = prepare_params(*p3, compute_dtype=jnp.float32,
                             vmem_budget_bytes=600 * 1024)
    assert params3["nh"] > 1, "expected hidden tiling to be engaged"
    out3 = jax.block_until_ready(net_forward(x3, params3))
    ref3 = jnp.maximum(x3 @ p3[0] + p3[1], 0.0) @ p3[2] + p3[3]
    assert out3.shape == (B3, ACT3)
    assert jnp.allclose(out3, ref3, atol=1e-4, rtol=1e-4), "hidden tiling mismatch"

    print("KERNEL_OK")
</pallas_src>

<mosaic_0001>
module attributes {stable_mosaic.version = 11 : i64} {
  func.func @_mlp_kernel(%arg0: i32, %arg1: i32, %arg2: memref<8x4xf32, #tpu.memory_space<vmem>>, %arg3: memref<4x128xf32, #tpu.memory_space<vmem>>, %arg4: memref<1x128xf32, #tpu.memory_space<vmem>>, %arg5: memref<128x2xf32, #tpu.memory_space<vmem>>, %arg6: memref<1x2xf32, #tpu.memory_space<vmem>>, %arg7: memref<8x2xf32, #tpu.memory_space<vmem>>, %arg8: memref<8x2xf32, #tpu.memory_space<vmem>>) attributes {dimension_semantics = [#tpu.dimension_semantics<parallel>, #tpu.dimension_semantics<arbitrary>], iteration_bounds = array<i64: 1, 1>, scalar_prefetch = 0 : i64, scratch_operands = 1 : i64, tpu.core_type = #tpu.core_type<tc>, window_params = [{transform_indices = @transform_0, window_bounds = array<i64: 8, 4>}, {transform_indices = @transform_1, window_bounds = array<i64: 4, 128>}, {transform_indices = @transform_2, window_bounds = array<i64: 1, 128>}, {transform_indices = @transform_3, window_bounds = array<i64: 128, 2>}, {pipeline_mode = #tpu.pipeline_mode<synchronous>, transform_indices = @transform_4, window_bounds = array<i64: 1, 2>}, {transform_indices = @transform_5, window_bounds = array<i64: 8, 2>}]} {
    %c0_i32 = arith.constant 0 : i32
    %0 = arith.cmpi eq, %arg1, %c0_i32 : i32
    %1 = arith.extui %0 : i1 to i32
    %c0_i32_0 = arith.constant 0 : i32
    %2 = arith.cmpi ne, %1, %c0_i32_0 : i32
    scf.if %2 {
      %cst_16 = arith.constant 0.000000e+00 : f32
      %19 = vector.broadcast %cst_16 : f32 to vector<8x2xf32>
      %c0_17 = arith.constant 0 : index
      %c0_18 = arith.constant 0 : index
      %20 = vector.load %arg8[%c0_17, %c0_18] : memref<8x2xf32, #tpu.memory_space<vmem>>, vector<8x2xf32>
      tpu.vector_store %arg8[%c0_17, %c0_18], %19 {strides = array<i32>} : memref<8x2xf32, #tpu.memory_space<vmem>>, vector<8x2xf32>,
    } else {
    }
    %c0 = arith.constant 0 : index
    %c0_1 = arith.constant 0 : index
    %3 = vector.load %arg2[%c0, %c0_1] : memref<8x4xf32, #tpu.memory_space<vmem>>, vector<8x4xf32>
    %c0_2 = arith.constant 0 : index
    %c0_3 = arith.constant 0 : index
    %4 = vector.load %arg3[%c0_2, %c0_3] : memref<4x128xf32, #tpu.memory_space<vmem>>, vector<4x128xf32>
    %cst = arith.constant dense<0.000000e+00> : vector<8x128xf32>
    %5 = tpu.matmul %3, %4, %cst {dimension_numbers = #tpu.dot_dimension_numbers<[1], [0], [0], [1], [0, 0, 1, 1], [], []>} : vector<8x4xf32>, vector<4x128xf32>, vector<8x128xf32> -> vector<8x128xf32>
    %c0_4 = arith.constant 0 : index
    %c0_5 = arith.constant 0 : index
    %6 = vector.load %arg4[%c0_4, %c0_5] : memref<1x128xf32, #tpu.memory_space<vmem>>, vector<1x128xf32>
    %7 = vector.broadcast %6 : vector<1x128xf32> to vector<8x128xf32>
    %8 = arith.addf %5, %7 : vector<8x128xf32>
    %cst_6 = arith.constant 0.000000e+00 : f32
    %9 = vector.broadcast %cst_6 : f32 to vector<8x128xf32>
    %10 = arith.maximumf %8, %9 : vector<8x128xf32>
    %c0_7 = arith.constant 0 : index
    %c0_8 = arith.constant 0 : index
    %11 = vector.load %arg8[%c0_7, %c0_8] : memref<8x2xf32, #tpu.memory_space<vmem>>, vector<8x2xf32>
    %c0_9 = arith.constant 0 : index
    %c0_10 = arith.constant 0 : index
    %12 = vector.load %arg5[%c0_9, %c0_10] : memref<128x2xf32, #tpu.memory_space<vmem>>, vector<128x2xf32>
    %cst_11 = arith.constant dense<0.000000e+00> : vector<8x2xf32>
    %13 = tpu.matmul %10, %12, %cst_11 {dimension_numbers = #tpu.dot_dimension_numbers<[1], [0], [0], [1], [0, 0, 1, 1], [], []>} : vector<8x128xf32>, vector<128x2xf32>, vector<8x2xf32> -> vector<8x2xf32>
    %14 = arith.addf %11, %13 : vector<8x2xf32>
    %c0_12 = arith.constant 0 : index
    %c0_13 = arith.constant 0 : index
    %15 = vector.load %arg8[%c0_12, %c0_13] : memref<8x2xf32, #tpu.memory_space<vmem>>, vector<8x2xf32>
    tpu.vector_store %arg8[%c0_12, %c0_13], %14 {strides = array<i32>} : memref<8x2xf32, #tpu.memory_space<vmem>>, vector<8x2xf32>,
    %c0_i32_14 = arith.constant 0 : i32
    %16 = arith.cmpi eq, %arg1, %c0_i32_14 : i32
    %17 = arith.extui %16 : i1 to i32
    %c0_i32_15 = arith.constant 0 : i32
    %18 = arith.cmpi ne, %17, %c0_i32_15 : i32
    scf.if %18 {
      %c0_16 = arith.constant 0 : index
      %c0_17 = arith.constant 0 : index
      %19 = vector.load %arg8[%c0_16, %c0_17] : memref<8x2xf32, #tpu.memory_space<vmem>>, vector<8x2xf32>
      %c0_18 = arith.constant 0 : index
      %c0_19 = arith.constant 0 : index
      %20 = vector.load %arg6[%c0_18, %c0_19] : memref<1x2xf32, #tpu.memory_space<vmem>>, vector<1x2xf32>
      %21 = vector.broadcast %20 : vector<1x2xf32> to vector<8x2xf32>
      %22 = arith.addf %19, %21 : vector<8x2xf32>
      %c0_20 = arith.constant 0 : index
      %c0_21 = arith.constant 0 : index
      %23 = vector.load %arg7[%c0_20, %c0_21] : memref<8x2xf32, #tpu.memory_space<vmem>>, vector<8x2xf32>
      tpu.vector_store %arg7[%c0_20, %c0_21], %22 {strides = array<i32>} : memref<8x2xf32, #tpu.memory_space<vmem>>, vector<8x2xf32>,
    } else {
    }
    return
  }
  func.func @transform_0(%arg0: i32, %arg1: i32) -> (i32, i32) {
    %c0_i32 = arith.constant 0 : i32
    %c0_i32_0 = arith.constant 0 : i32
    return %arg0, %c0_i32 : i32, i32
  }
  func.func @transform_1(%arg0: i32, %arg1: i32) -> (i32, i32) {
    %c0_i32 = arith.constant 0 : i32
    %c0_i32_0 = arith.constant 0 : i32
    return %c0_i32, %arg1 : i32, i32
  }
  func.func @transform_2(%arg0: i32, %arg1: i32) -> (i32, i32) {
    %c0_i32 = arith.constant 0 : i32
    %c0_i32_0 = arith.constant 0 : i32
    return %c0_i32, %arg1 : i32, i32
  }
  func.func @transform_3(%arg0: i32, %arg1: i32) -> (i32, i32) {
    %c0_i32 = arith.constant 0 : i32
    %c0_i32_0 = arith.constant 0 : i32
    return %arg1, %c0_i32 : i32, i32
  }
  func.func @transform_4(%arg0: i32, %arg1: i32) -> (i32, i32) {
    %c0_i32 = arith.constant 0 : i32
    %c0_i32_0 = arith.constant 0 : i32
    %c0_i32_1 = arith.constant 0 : i32
    return %c0_i32, %c0_i32_0 : i32, i32
  }
  func.func @transform_5(%arg0: i32, %arg1: i32) -> (i32, i32) {
    %c0_i32 = arith.constant 0 : i32
    %c0_i32_0 = arith.constant 0 : i32
    return %arg0, %c0_i32 : i32, i32
  }
}

</mosaic_0001>

<llo_original>
// kernel: tpu_custom_call.1
$region0: #{tpu_custom_call.1}
  #allocation0 [shape = 'u32[]', space=smem, size = 0x4, offset = 0x4, fixed_abs, tag = 'smem constant byte address 0x4 - core index']
  #allocation1 [shape = 'u32[144,128]{1,0:T(1,128)}', space=vmem, size = 0x12000, scoped, tag = 'internal scratch']
  #allocation2 [shape = 'f32[8,2]{1,0:T(8,128)}', space=vmem, size = 0x1000, scoped, tag = 'scratch operand']
  %s0 = inlined_call_operand.vmem [shape: f32[8,4], index: 0, kind: input, shape index: {}]
  %s1 = inlined_call_operand.vmem [shape: f32[4,128], index: 1, kind: input, shape index: {}]
  %s2 = inlined_call_operand.vmem [shape: f32[1,128], index: 2, kind: input, shape index: {}]
  %s3 = inlined_call_operand.vmem [shape: f32[128,2], index: 3, kind: input, shape index: {}]
  %s4 = inlined_call_operand.vmem [shape: f32[1,2], index: 4, kind: input, shape index: {}]
  %s5 = inlined_call_operand.vmem [shape: f32[8,2], index: 5, kind: output, shape index: {}]
  %s6 = sld [smem:[#allocation0]]
  $region38: #{tpu_custom_call.1} parent=0
    _
  %s8 = ssub.s32 1, %s6
  %s9 = scalar_select 0, %s8, %s6
  // Predicated region
  $region2: #{tpu_custom_call.1} parent=0 // pred_check
    _
  $region3: #{tpu_custom_call.1} parent=0 // pred_check_branch
    %11 = sbr.rel (0) target = $region5
  $region4: #{tpu_custom_call.1} parent=0 // pred_region
    _
  $region5: #{tpu_custom_call.1} parent=0 // pred_fallthru
    _
  // Predicated region
  $region6: #{tpu_custom_call.1} parent=0 // pred_check
    _
  $region7: #{tpu_custom_call.1} parent=0 // pred_check_branch
    %13 = sbr.rel (0) target = $region9
  $region8: #{tpu_custom_call.1} parent=0 // pred_region
    _
  $region9: #{tpu_custom_call.1} parent=0 // pred_fallthru
    _
  // Predicated region
  $region10: #{tpu_custom_call.1} parent=0 // pred_check
    _
  $region11: #{tpu_custom_call.1} parent=0 // pred_check_branch
    %15 = sbr.rel (0) target = $region13
  $region12: #{tpu_custom_call.1} parent=0 // pred_region
    _
  $region13: #{tpu_custom_call.1} parent=0 // pred_fallthru
    _
  // Predicated region
  $region14: #{tpu_custom_call.1} parent=0 // pred_check
    _
  $region15: #{tpu_custom_call.1} parent=0 // pred_check_branch
    %17 = sbr.rel (0) target = $region17
  $region16: #{tpu_custom_call.1} parent=0 // pred_region
    _
  $region17: #{tpu_custom_call.1} parent=0 // pred_fallthru
    _
  // Predicated region
  $region18: #{tpu_custom_call.1} parent=0 // pred_check
    _
  $region19: #{tpu_custom_call.1} parent=0 // pred_check_branch
    %19 = sbr.rel (0) target = $region21
  $region20: #{tpu_custom_call.1} parent=0 // pred_region
    _
  $region21: #{tpu_custom_call.1} parent=0 // pred_fallthru
    _
  %p20 = scmp.eq.s32.totalorder 0, 0
  // Predicated region
  $region22: #{tpu_custom_call.1} parent=0 // pred_check
    %p21 = pneg %p20
  $region23: #{tpu_custom_call.1} parent=0 // pred_check_branch
    %23 = sbr.rel (%p21) target = $region25
  $region24: #{tpu_custom_call.1} parent=0 // pred_region
    %vm24 = vcmask 15360
    %25 = vst.msk [vmem:[#allocation2] sm:$0xff] %vm24, 0.0
  $region25: #{tpu_custom_call.1} parent=0 // pred_fallthru
    _
  %v26 = vld [vmem:[%s0] sm:$0xff]
  %v27 = vld [vmem:[%s1] sm:$0xf]
  %v28 = vld [vmem:[%s2] sm:$0x1]
  %v30 = vlaneseq
  %v31 = vshrl.u32 %v30, 7
  %v32 = vsub.s32 0, %v31
  %v33 = vrot.slane %v28, %v32
  %vm35 = vcmask 31744
  %v37 = vsel %vm35, %v26, 0
  %vm39 = vcmask 1043456
  %v41 = vsel %vm39, %v27, 0
  %43 = vmatprep.subr.mxu0 0.0
  %44 = vmatpush1.msra.mxu0 0.0
  %45 = vmatprep.subr.mxu0 0.0
  %46 = vmatpush1.msra.mxu0 0.0
  %47 = vmatprep.subr.mxu0 0.0
  %48 = vmatpush1.msra.mxu0 0.0
  %49 = vmatprep.subr.mxu0 0.0
  %50 = vmatpush1.msra.mxu0 0.0
  %51 = vmatprep.subr.mxu0 0.0
  %52 = vmatpush1.msra.mxu0 0.0
  %53 = vmatprep.subr.mxu0 0.0
  %54 = vmatpush1.msra.mxu0 0.0
  %55 = vmatprep.subr.mxu0 0.0
  %56 = vmatpush1.msra.mxu0 0.0
  %57 = vmatprep.subr.mxu0 0.0
  %58 = vmatpush1.msra.mxu0 0.0
  %59 = vmatprep.subr.mxu0 0.0
  %60 = vmatpush1.msra.mxu0 0.0
  %61 = vmatprep.subr.mxu0 0.0
  %62 = vmatpush1.msra.mxu0 0.0
  %63 = vmatprep.subr.mxu0 0.0
  %64 = vmatpush1.msra.mxu0 0.0
  %65 = vmatprep.subr.mxu0 0.0
  %66 = vmatpush1.msra.mxu0 0.0
  %67 = vmatprep.subr.mxu0 0.0
  %68 = vmatpush1.msra.mxu0 0.0
  %69 = vmatprep.subr.mxu0 0.0
  %70 = vmatpush1.msra.mxu0 0.0
  %71 = vmatprep.subr.mxu0 0.0
  %72 = vmatpush1.msra.mxu0 0.0
  %73 = vmatprep.subr.mxu0 0.0
  %74 = vmatpush1.msra.mxu0 %v41
  %75 = vmatprep.subr.mxu0 0.0
  %76 = vmatpush2.msra.mxu0 0.0
  %77 = vmatprep.subr.mxu0 0.0
  %78 = vmatpush2.msra.mxu0 0.0
  %79 = vmatprep.subr.mxu0 0.0
  %80 = vmatpush2.msra.mxu0 0.0
  %81 = vmatprep.subr.mxu0 0.0
  %82 = vmatpush2.msra.mxu0 0.0
  %83 = vmatprep.subr.mxu0 0.0
  %84 = vmatpush2.msra.mxu0 0.0
  %85 = vmatprep.subr.mxu0 0.0
  %86 = vmatpush2.msra.mxu0 0.0
  %87 = vmatprep.subr.mxu0 0.0
  %88 = vmatpush2.msra.mxu0 0.0
  %89 = vmatprep.subr.mxu0 0.0
  %90 = vmatpush2.msra.mxu0 0.0
  %91 = vmatprep.subr.mxu0 0.0
  %92 = vmatpush2.msra.mxu0 0.0
  %93 = vmatprep.subr.mxu0 0.0
  %94 = vmatpush2.msra.mxu0 0.0
  %95 = vmatprep.subr.mxu0 0.0
  %96 = vmatpush2.msra.mxu0 0.0
  %97 = vmatprep.subr.mxu0 0.0
  %98 = vmatpush2.msra.mxu0 0.0
  %99 = vmatprep.subr.mxu0 0.0
  %100 = vmatpush2.msra.mxu0 0.0
  %101 = vmatprep.subr.mxu0 0.0
  %102 = vmatpush2.msra.mxu0 0.0
  %103 = vmatprep.subr.mxu0 0.0
  %104 = vmatpush2.msra.mxu0 0.0
  %105 = vmatprep.subr.mxu0 0.0
  %106 = vmatpush2.msra.mxu0 0.0
  %107 = vmatprep.mubr.f32.mxu0 0.0
  %108 = vmatmul.mubr.f32.gmra.mxu0 %v37
  %v109 = vpop.f32.mrf.mxu0
  %v110 = vadd.f32 %v33, %v109
  %v111 = vpop.f32.mrf.mxu0
  %112 = vdwg.mxu0
  %v113 = vmax.f32 %v110, 0.0
  %v114 = vld [vmem:[#allocation2] sm:$0xff]
  %v115 = vld [vmem:[%s3] sm:$0xff]
  %v116 = vld [vmem:[%s3 + $0x8] sm:$0xff]
  %v117 = vld [vmem:[%s3 + $0x10] sm:$0xff]
  %v118 = vld [vmem:[%s3 + $0x18] sm:$0xff]
  %v119 = vld [vmem:[%s3 + $0x20] sm:$0xff]
  %v120 = vld [vmem:[%s3 + $0x28] sm:$0xff]
  %v121 = vld [vmem:[%s3 + $0x30] sm:$0xff]
  %v122 = vld [vmem:[%s3 + $0x38] sm:$0xff]
  %v123 = vld [vmem:[%s3 + $0x40] sm:$0xff]
  %v124 = vld [vmem:[%s3 + $0x48] sm:$0xff]
  %v125 = vld [vmem:[%s3 + $0x50] sm:$0xff]
  %v126 = vld [vmem:[%s3 + $0x58] sm:$0xff]
  %v127 = vld [vmem:[%s3 + $0x60] sm:$0xff]
  %v128 = vld [vmem:[%s3 + $0x68] sm:$0xff]
  %v129 = vld [vmem:[%s3 + $0x70] sm:$0xff]
  %v130 = vld [vmem:[%s3 + $0x78] sm:$0xff]
  %131 = vmatprep.subr.mxu0 0.0
  %132 = vmatpush1.msra.mxu0 %v130
  %133 = vmatprep.subr.mxu0 0.0
  %134 = vmatpush1.msra.mxu0 %v129
  %135 = vmatprep.subr.mxu0 0.0
  %136 = vmatpush1.msra.mxu0 %v128
  %137 = vmatprep.subr.mxu0 0.0
  %138 = vmatpush1.msra.mxu0 %v127
  %139 = vmatprep.subr.mxu0 0.0
  %140 = vmatpush1.msra.mxu0 %v126
  %141 = vmatprep.subr.mxu0 0.0
  %142 = vmatpush1.msra.mxu0 %v125
  %143 = vmatprep.subr.mxu0 0.0
  %144 = vmatpush1.msra.mxu0 %v124
  %145 = vmatprep.subr.mxu0 0.0
  %146 = vmatpush1.msra.mxu0 %v123
  %147 = vmatprep.subr.mxu0 0.0
  %148 = vmatpush1.msra.mxu0 %v122
  %149 = vmatprep.subr.mxu0 0.0
  %150 = vmatpush1.msra.mxu0 %v121
  %151 = vmatprep.subr.mxu0 0.0
  %152 = vmatpush1.msra.mxu0 %v120
  %153 = vmatprep.subr.mxu0 0.0
  %154 = vmatpush1.msra.mxu0 %v119
  %155 = vmatprep.subr.mxu0 0.0
  %156 = vmatpush1.msra.mxu0 %v118
  %157 = vmatprep.subr.mxu0 0.0
  %158 = vmatpush1.msra.mxu0 %v117
  %159 = vmatprep.subr.mxu0 0.0
  %160 = vmatpush1.msra.mxu0 %v116
  %161 = vmatprep.subr.mxu0 0.0
  %162 = vmatpush1.msra.mxu0 %v115
  %163 = vmatprep.subr.mxu0 0.0
  %164 = vmatpush2.msra.mxu0 0.0
  %165 = vmatprep.subr.mxu0 0.0
  %166 = vmatpush2.msra.mxu0 0.0
  %167 = vmatprep.subr.mxu0 0.0
  %168 = vmatpush2.msra.mxu0 0.0
  %169 = vmatprep.subr.mxu0 0.0
  %170 = vmatpush2.msra.mxu0 0.0
  %171 = vmatprep.subr.mxu0 0.0
  %172 = vmatpush2.msra.mxu0 0.0
  %173 = vmatprep.subr.mxu0 0.0
  %174 = vmatpush2.msra.mxu0 0.0
  %175 = vmatprep.subr.mxu0 0.0
  %176 = vmatpush2.msra.mxu0 0.0
  %177 = vmatprep.subr.mxu0 0.0
  %178 = vmatpush2.msra.mxu0 0.0
  %179 = vmatprep.subr.mxu0 0.0
  %180 = vmatpush2.msra.mxu0 0.0
  %181 = vmatprep.subr.mxu0 0.0
  %182 = vmatpush2.msra.mxu0 0.0
  %183 = vmatprep.subr.mxu0 0.0
  %184 = vmatpush2.msra.mxu0 0.0
  %185 = vmatprep.subr.mxu0 0.0
  %186 = vmatpush2.msra.mxu0 0.0
  %187 = vmatprep.subr.mxu0 0.0
  %188 = vmatpush2.msra.mxu0 0.0
  %189 = vmatprep.subr.mxu0 0.0
  %190 = vmatpush2.msra.mxu0 0.0
  %191 = vmatprep.subr.mxu0 0.0
  %192 = vmatpush2.msra.mxu0 0.0
  %193 = vmatprep.subr.mxu0 0.0
  %194 = vmatpush2.msra.mxu0 0.0
  %195 = vmatprep.mubr.f32.mxu0 0.0
  %196 = vmatmul.mubr.f32.gmra.mxu0 %v113
  %v197 = vpop.f32.mrf.mxu0
  %v198 = vadd.f32 0.0, %v197
  %v199 = vpop.f32.mrf.mxu0
  %200 = vdwg.mxu0
  %v201 = vadd.f32 %v114, %v198
  %vm202 = vcmask 15360
  %203 = vst.msk [vmem:[#allocation2] sm:$0xff] %vm202, %v201
  // Predicated region
  $region26: #{tpu_custom_call.1} parent=0 // pred_check
    %p204 = pneg %p20
  $region27: #{tpu_custom_call.1} parent=0 // pred_check_branch
    %206 = sbr.rel (%p204) target = $region29
  $region28: #{tpu_custom_call.1} parent=0 // pred_region
    %v207 = vld [vmem:[#allocation2] sm:$0xff]
    %v208 = vld [vmem:[%s4] sm:$0x1]
    %v210 = vlaneseq
    %v211 = vshrl.u32 %v210, 7
    %v212 = vsub.s32 0, %v211
    %v213 = vrot.slane %v208, %v212
    %v215 = vadd.f32 %v207, %v213
    %216 = vst.msk [vmem:[%s5] sm:$0xff] %vm202, %v215
  $region29: #{tpu_custom_call.1} parent=0 // pred_fallthru
    _
  // Predicated region
  $region30: #{tpu_custom_call.1} parent=0 // pred_check
    _
  $region31: #{tpu_custom_call.1} parent=0 // pred_check_branch
    %218 = sbr.rel (0) target = $region33
  $region32: #{tpu_custom_call.1} parent=0 // pred_region
    _
  $region33: #{tpu_custom_call.1} parent=0 // pred_fallthru
    _
  // Predicated region
  $region34: #{tpu_custom_call.1} parent=0 // pred_check
    _
  $region35: #{tpu_custom_call.1} parent=0 // pred_check_branch
    %220 = sbr.rel (0) target = $region37
  $region36: #{tpu_custom_call.1} parent=0 // pred_region
    _
  $region37: #{tpu_custom_call.1} parent=0 // pred_fallthru
    _

</llo_original>
